<compile_context>
chip_gen: v5e
topology: v5e:2x2
jax: 0.10.0
libtpu: 0.0.40
codegen_flags: <defaults>
</compile_context>

<pallas_src>
import math
import numpy as np

import jax
import jax.numpy as jnp
from jax import lax
from jax.experimental import pallas as pl
from jax.experimental.pallas import tpu as pltpu

# ---------------- configuration (small but consistent with __init__) ---------
B, S = 2, 8
EMB = 32                 # embedding_size (== hidden_size, required by ACT)
HID = 32                 # hidden_size
NUM_LAYERS = 3           # num_layers == max_hop for ACT
NUM_HEADS = 2
KEY_DEPTH = 32           # total_key_depth
VAL_DEPTH = 32           # total_value_depth
FILTER = 64              # filter_size
MAX_LEN = 64             # max_length (only first S rows of timing signal used)
THRESHOLD = 1.0 - 0.1    # ACT threshold
LN_EPS = 1e-6
BS = B * S               # flattened token count

# slab layout constants
W_ROWS = 2 * HID + FILTER            # 128 rows of bf16 weights
VEC_ROWS = 8                         # small f32 vector block (8-row aligned)
SIG_BASE = VEC_ROWS                  # per-step combined signal starts here
V_ROWS = VEC_ROWS + NUM_LAYERS * BS  # 8 + 48 = 56 rows of f32

_VMEM = pl.BlockSpec(memory_space=pltpu.MemorySpace.VMEM)
_SMEM = pl.BlockSpec(memory_space=pltpu.MemorySpace.SMEM)


# ---------------- glue: sinusoidal timing signal (as in _gen_timing_signal) --
def gen_timing_signal(length, channels, min_timescale=1.0, max_timescale=1.0e4):
    position = np.arange(length, dtype=np.float64)
    num_timescales = channels // 2
    log_timescale_increment = (math.log(float(max_timescale) / float(min_timescale))
                               / (float(num_timescales) - 1))
    inv_timescales = min_timescale * np.exp(
        np.arange(num_timescales, dtype=np.float64) * -log_timescale_increment)
    scaled_time = position[:, None] * inv_timescales[None, :]
    signal = np.concatenate([np.sin(scaled_time), np.cos(scaled_time)], axis=1)
    signal = np.pad(signal, [[0, 0], [0, channels % 2]], 'constant')
    return jnp.asarray(signal.reshape(1, length, channels), dtype=jnp.float32)


# ---------------- single fused kernel: whole Encoder.forward ------------------
def encoder_kernel(x_ref, w_ref, v_ref, pb_ref, out_ref):
    hdk = KEY_DEPTH // NUM_HEADS
    hdv = VAL_DEPTH // NUM_HEADS

    def layer_norm(x, g, b):
        mean = jnp.mean(x, axis=-1, keepdims=True)
        d = x - mean
        var = jnp.sum(d * d, axis=-1, keepdims=True) / (x.shape[-1] - 1)
        # exact divide (review: approx reciprocal drifts vs. the reference LN)
        return g * d / (jnp.sqrt(var) + LN_EPS) + b

    p_b = pb_ref[0, 0]                                      # SMEM scalar (p.bias)

    # ---- embedding projection (Linear, bias=False); emb_w read at use -------
    state0 = jnp.dot(x_ref[...].astype(jnp.bfloat16),
                     w_ref[0:HID, :][:, 0:HID],
                     preferred_element_type=jnp.float32)    # (BS, HID)

    def step_body(step, carry):
        state, prev, halt, rem, nup = carry

        # --- precomputed timing + per-step position signal (from the slab) ---
        row = pl.multiple_of(SIG_BASE + step * BS, 8)
        sig = v_ref[pl.ds(row, BS), :][:, :HID]             # (BS, HID)
        s = state + sig

        vec = v_ref[0:VEC_ROWS, :]                          # (8, 128) f32 block
        p_w = vec[0:1, 0:HID]                               # ACT halting weight

        # --- halting probability p = sigmoid(Linear(state)) ---
        p = jax.nn.sigmoid(jnp.sum(s * p_w, axis=-1, keepdims=True) + p_b)

        # --- ACT gating (exact formulas from ACT_basic.forward) ---
        sr0 = (halt < 1.0).astype(jnp.float32)
        comb = halt + p * sr0
        new_halted = (comb > THRESHOLD).astype(jnp.float32) * sr0
        still_running = (comb <= THRESHOLD).astype(jnp.float32) * sr0
        halt = halt + p * still_running
        rem = rem + new_halted * (1.0 - halt)
        halt = halt + new_halted * rem
        nup = nup + still_running + new_halted
        uw = p * still_running + new_halted * rem           # (BS, 1)

        # --- EncoderLayer fn(s): pre-norm MHA + ReLU FFN ---
        xn = layer_norm(s, vec[1:2, 0:32], vec[1:2, 32:64])

        wblk_a = w_ref[0:HID, :]                            # bf16: emb_w | w_qkv
        qkv = jnp.dot(xn.astype(jnp.bfloat16), wblk_a[:, HID:],
                      preferred_element_type=jnp.float32)   # (BS, 2K+V)
        qkv3 = qkv.reshape(B, S, 2 * KEY_DEPTH + VAL_DEPTH)

        # stack heads into the batch dim -> one batched attention per layer
        q_bh = jnp.concatenate(
            [qkv3[:, :, h * hdk:(h + 1) * hdk] for h in range(NUM_HEADS)], axis=0)
        k_bh = jnp.concatenate(
            [qkv3[:, :, KEY_DEPTH + h * hdk:KEY_DEPTH + (h + 1) * hdk]
             for h in range(NUM_HEADS)], axis=0)
        v_bh = jnp.concatenate(
            [qkv3[:, :, 2 * KEY_DEPTH + h * hdv:2 * KEY_DEPTH + (h + 1) * hdv]
             for h in range(NUM_HEADS)], axis=0)            # (B*H, S, hd)

        logits = jnp.einsum('bqd,bkd->bqk', q_bh, k_bh,
                            preferred_element_type=jnp.float32)   # scale folded in Q
        m = jnp.max(logits, axis=-1, keepdims=True)
        e = jnp.exp(logits - m)
        attn = e * pl.reciprocal(jnp.sum(e, axis=-1, keepdims=True), approx=True)
        ctx = jnp.einsum('bqk,bkd->bqd', attn, v_bh,
                         preferred_element_type=jnp.float32)      # (B*H, S, hdv)
        ctx2d = jnp.concatenate(
            [ctx[h * B:(h + 1) * B].reshape(BS, hdv) for h in range(NUM_HEADS)],
            axis=-1)                                              # (BS, VD)

        wblk_b = w_ref[HID:2 * HID, :]                      # bf16: w_o | w_1
        y2d = jnp.dot(ctx2d.astype(jnp.bfloat16), wblk_b[:, 0:HID],
                      preferred_element_type=jnp.float32)   # (BS, HID)
        xr = s + y2d                                        # residual (dropout = 0)

        xn2 = layer_norm(xr, vec[1:2, 64:96], vec[1:2, 96:128])
        h1 = jnp.maximum(
            jnp.dot(xn2.astype(jnp.bfloat16), wblk_b[:, HID:HID + FILTER],
                    preferred_element_type=jnp.float32) + vec[3:4, 0:FILTER], 0.0)
        wblk_c = w_ref[2 * HID:2 * HID + FILTER, :]         # bf16: w_2
        y2 = jnp.dot(h1.astype(jnp.bfloat16), wblk_c[:, 0:HID],
                     preferred_element_type=jnp.float32) + vec[2:3, 64:96]
        new_state = xr + y2                                 # residual

        # --- weighted state accumulation ---
        prev = new_state * uw + prev * (1.0 - uw)
        return (new_state, prev, halt, rem, nup)

    z_bh = jnp.zeros((BS, HID), jnp.float32)
    z_1 = jnp.zeros((BS, 1), jnp.float32)
    _, prev, _, rem, nup = lax.fori_loop(
        0, NUM_LAYERS, step_body, (state0, z_bh, z_1, z_1, z_1))

    # ---- final Encoder LayerNorm + single lane-dense writeback ---------------
    vec = v_ref[0:VEC_ROWS, :]
    y = layer_norm(prev, vec[2:3, 0:32], vec[2:3, 32:64])
    pad = jnp.zeros((BS, 128 - HID - 2), jnp.float32)
    out_ref[...] = jnp.concatenate([y, rem, nup, pad], axis=-1)


# ---------------- Encoder.forward --------------------------------------------
@jax.jit
def encoder_forward(inputs, mask, params):
    del mask  # unused in the universal+ACT path (faithful to the reference)
    x2d = inputs.reshape(BS, EMB)                  # only per-call prep op

    out = pl.pallas_call(
        encoder_kernel,
        out_shape=jax.ShapeDtypeStruct((BS, 128), jnp.float32),
        in_specs=[_VMEM, _VMEM, _VMEM, _SMEM],
        out_specs=_VMEM,
    )(x2d, params['w_slab'], params['v_slab'], params['p_b'])

    y = out[:, :HID].reshape(B, S, HID)
    rem = out[:, HID].reshape(B, S)
    nup = out[:, HID + 1].reshape(B, S)
    return y, (rem, nup)


# ---------------- deterministic parameter init + slab packing -----------------
def init_params(key):
    ks = jax.random.split(key, 8)

    def nrm(k, shape, scale=0.05):
        return (scale * jax.random.normal(k, shape)).astype(jnp.float32)

    hdk = KEY_DEPTH // NUM_HEADS
    emb_w = nrm(ks[0], (EMB, HID))                    # embedding_proj (no bias)
    p_w = nrm(ks[1], (1, HID))                        # ACT p: Linear(H, 1).weight
    w_q = nrm(ks[2], (HID, KEY_DEPTH))
    w_k = nrm(ks[3], (HID, KEY_DEPTH))
    w_v = nrm(ks[4], (HID, VAL_DEPTH))
    w_o = nrm(ks[5], (VAL_DEPTH, HID))
    w_1 = nrm(ks[6], (HID, FILTER))
    w_2 = nrm(ks[7], (FILTER, HID))
    b_1 = jnp.zeros((FILTER,), jnp.float32)
    b_2 = jnp.zeros((HID,), jnp.float32)
    ln1_g = jnp.ones((HID,), jnp.float32); ln1_b = jnp.zeros((HID,), jnp.float32)
    ln2_g = jnp.ones((HID,), jnp.float32); ln2_b = jnp.zeros((HID,), jnp.float32)
    lnf_g = jnp.ones((HID,), jnp.float32); lnf_b = jnp.zeros((HID,), jnp.float32)

    # --- bf16 weight slab: rows [0:32)=emb_w|w_qkv, [32:64)=w_o|w_1, [64:128)=w_2
    w_qkv = jnp.concatenate([w_q * (hdk ** -0.5), w_k, w_v], axis=1)  # scale folded
    w_slab = jnp.zeros((W_ROWS, 128), jnp.float32)
    w_slab = w_slab.at[0:HID, 0:HID].set(emb_w)
    w_slab = w_slab.at[0:HID, HID:HID + 2 * KEY_DEPTH + VAL_DEPTH].set(w_qkv)
    w_slab = w_slab.at[HID:2 * HID, 0:HID].set(w_o)
    w_slab = w_slab.at[HID:2 * HID, HID:HID + FILTER].set(w_1)
    w_slab = w_slab.at[2 * HID:2 * HID + FILTER, 0:HID].set(w_2)
    w_slab = w_slab.astype(jnp.bfloat16)

    # --- f32 vector/signal slab ---
    tsig = jnp.tile(gen_timing_signal(MAX_LEN, HID)[0, :S, :], (B, 1))  # (BS, HID)
    psig = gen_timing_signal(NUM_LAYERS, HID)[0]                        # (L, HID)
    sig = (tsig[None, :, :] + psig[:, None, :]).reshape(NUM_LAYERS * BS, HID)

    v_slab = jnp.zeros((V_ROWS, 128), jnp.float32)
    v_slab = v_slab.at[0, 0:HID].set(p_w[0])
    v_slab = v_slab.at[1, 0:32].set(ln1_g)
    v_slab = v_slab.at[1, 32:64].set(ln1_b)
    v_slab = v_slab.at[1, 64:96].set(ln2_g)
    v_slab = v_slab.at[1, 96:128].set(ln2_b)
    v_slab = v_slab.at[2, 0:32].set(lnf_g)
    v_slab = v_slab.at[2, 32:64].set(lnf_b)
    v_slab = v_slab.at[2, 64:96].set(b_2)
    v_slab = v_slab.at[3, 0:FILTER].set(b_1)
    v_slab = v_slab.at[SIG_BASE:SIG_BASE + NUM_LAYERS * BS, 0:HID].set(sig)

    return {
        'w_slab': w_slab,                                  # (128,128) bf16
        'v_slab': v_slab,                                  # (56,128)  f32
        'p_b': jnp.ones((1, 1), jnp.float32),              # p.bias.data.fill_(1)
    }


if __name__ == "__main__":
    key = jax.random.PRNGKey(0)
    kp, kx = jax.random.split(key)
    params = init_params(kp)
    inputs = jax.random.normal(kx, (B, S, EMB), dtype=jnp.float32)
    mask = jnp.zeros((B, 1, S), dtype=jnp.bool_)   # unused in this path

    y, (rem, nup) = encoder_forward(inputs, mask, params)
    jax.block_until_ready(y)
    assert y.shape == (B, S, HID)
    assert rem.shape == (B, S) and nup.shape == (B, S)
    assert bool(jnp.all(jnp.isfinite(y)))
    assert bool(jnp.all(jnp.isfinite(rem))) and bool(jnp.all(jnp.isfinite(nup)))
    print("KERNEL_OK")
</pallas_src>

<mosaic_0001>
module attributes {stable_mosaic.version = 11 : i64} {
  func.func @encoder_kernel(%arg0: memref<16x32xf32, #tpu.memory_space<vmem>>, %arg1: memref<128x128xbf16, #tpu.memory_space<vmem>>, %arg2: memref<56x128xf32, #tpu.memory_space<vmem>>, %arg3: memref<1x1xf32, #tpu.memory_space<smem>>, %arg4: memref<16x128xf32, #tpu.memory_space<vmem>>) attributes {dimension_semantics = [], scalar_prefetch = 0 : i64, scratch_operands = 0 : i64, tpu.core_type = #tpu.core_type<tc>} {
    %c0 = arith.constant 0 : index
    %c0_0 = arith.constant 0 : index
    %0 = memref.load %arg3[%c0, %c0_0] : memref<1x1xf32, #tpu.memory_space<smem>>
    %c0_1 = arith.constant 0 : index
    %c0_2 = arith.constant 0 : index
    %1 = vector.load %arg0[%c0_1, %c0_2] : memref<16x32xf32, #tpu.memory_space<vmem>>, vector<16x32xf32>
    %2 = arith.truncf %1 : vector<16x32xf32> to vector<16x32xbf16>
    %c0_3 = arith.constant 0 : index
    %c0_4 = arith.constant 0 : index
    %3 = vector.load %arg1[%c0_3, %c0_4] : memref<128x128xbf16, #tpu.memory_space<vmem>>, vector<32x128xbf16>
    %4 = vector.extract_strided_slice %3 {offsets = [0, 0], sizes = [32, 32], strides = [1, 1]} : vector<32x128xbf16> to vector<32x32xbf16>
    %cst = arith.constant dense<0.000000e+00> : vector<16x32xf32>
    %5 = tpu.matmul %2, %4, %cst {dimension_numbers = #tpu.dot_dimension_numbers<[1], [0], [0], [1], [0, 0, 1, 1], [], []>} : vector<16x32xbf16>, vector<32x32xbf16>, vector<16x32xf32> -> vector<16x32xf32>
    %cst_5 = arith.constant 0.000000e+00 : f32
    %6 = vector.broadcast %cst_5 : f32 to vector<16x32xf32>
    %cst_6 = arith.constant 0.000000e+00 : f32
    %7 = vector.broadcast %cst_6 : f32 to vector<16x1xf32>
    %c0_i32 = arith.constant 0 : i32
    %c3_i32 = arith.constant 3 : i32
    %8 = arith.addi %c0_i32, %c3_i32 : i32
    %c1_i32 = arith.constant 1 : i32
    %9:5 = scf.for %arg5 = %c0_i32 to %8 step %c1_i32 iter_args(%arg6 = %5, %arg7 = %6, %arg8 = %7, %arg9 = %7, %arg10 = %7) -> (vector<16x32xf32>, vector<16x32xf32>, vector<16x1xf32>, vector<16x1xf32>, vector<16x1xf32>)  : i32 {
      %c16_i32 = arith.constant 16 : i32
      %36 = arith.muli %arg5, %c16_i32 : i32
      %c8_i32 = arith.constant 8 : i32
      %37 = arith.addi %c8_i32, %36 : i32
      %38 = tpu.assume_multiple %37, 8 : i32
      %39 = arith.index_cast %38 : i32 to index
      %c0_18 = arith.constant 0 : index
      %40 = vector.load %arg2[%39, %c0_18] : memref<56x128xf32, #tpu.memory_space<vmem>>, vector<16x128xf32>
      %41 = vector.extract_strided_slice %40 {offsets = [0, 0], sizes = [16, 32], strides = [1, 1]} : vector<16x128xf32> to vector<16x32xf32>
      %42 = arith.addf %arg6, %41 : vector<16x32xf32>
      %c0_19 = arith.constant 0 : index
      %c0_20 = arith.constant 0 : index
      %43 = vector.load %arg2[%c0_19, %c0_20] : memref<56x128xf32, #tpu.memory_space<vmem>>, vector<8x128xf32>
      %44 = vector.extract_strided_slice %43 {offsets = [0, 0], sizes = [1, 32], strides = [1, 1]} : vector<8x128xf32> to vector<1x32xf32>
      %45 = vector.broadcast %44 : vector<1x32xf32> to vector<16x32xf32>
      %46 = arith.mulf %42, %45 : vector<16x32xf32>
      %cst_21 = arith.constant dense<0.000000e+00> : vector<16xf32>
      %47 = vector.multi_reduction <add>, %46, %cst_21 [1] : vector<16x32xf32> to vector<16xf32>
      %48 = vector.shape_cast %47 : vector<16xf32> to vector<16x1xf32>
      %49 = vector.broadcast %0 : f32 to vector<16x1xf32>
      %50 = arith.addf %48, %49 : vector<16x1xf32>
      %51 = arith.negf %50 : vector<16x1xf32>
      %52 = math.exp %51 : vector<16x1xf32>
      %cst_22 = arith.constant 1.000000e+00 : f32
      %53 = vector.broadcast %cst_22 : f32 to vector<16x1xf32>
      %54 = arith.addf %53, %52 : vector<16x1xf32>
      %55 = arith.divf %53, %54 : vector<16x1xf32>
      %cst_23 = arith.constant 1.000000e+00 : f32
      %56 = vector.broadcast %cst_23 : f32 to vector<16x1xf32>
      %57 = arith.cmpf olt, %arg8, %56 : vector<16x1xf32>
      %58 = arith.extui %57 : vector<16x1xi1> to vector<16x1xi32>
      %59 = arith.sitofp %58 : vector<16x1xi32> to vector<16x1xf32>
      %60 = arith.mulf %55, %59 : vector<16x1xf32>
      %61 = arith.addf %arg8, %60 : vector<16x1xf32>
      %cst_24 = arith.constant 0.899999976 : f32
      %62 = vector.broadcast %cst_24 : f32 to vector<16x1xf32>
      %63 = arith.cmpf ogt, %61, %62 : vector<16x1xf32>
      %64 = arith.extui %63 : vector<16x1xi1> to vector<16x1xi32>
      %65 = arith.sitofp %64 : vector<16x1xi32> to vector<16x1xf32>
      %66 = arith.mulf %65, %59 : vector<16x1xf32>
      %cst_25 = arith.constant 0.899999976 : f32
      %67 = vector.broadcast %cst_25 : f32 to vector<16x1xf32>
      %68 = arith.cmpf ole, %61, %67 : vector<16x1xf32>
      %69 = arith.extui %68 : vector<16x1xi1> to vector<16x1xi32>
      %70 = arith.sitofp %69 : vector<16x1xi32> to vector<16x1xf32>
      %71 = arith.mulf %70, %59 : vector<16x1xf32>
      %72 = arith.mulf %55, %71 : vector<16x1xf32>
      %73 = arith.addf %arg8, %72 : vector<16x1xf32>
      %cst_26 = arith.constant 1.000000e+00 : f32
      %74 = vector.broadcast %cst_26 : f32 to vector<16x1xf32>
      %75 = arith.subf %74, %73 : vector<16x1xf32>
      %76 = arith.mulf %66, %75 : vector<16x1xf32>
      %77 = arith.addf %arg9, %76 : vector<16x1xf32>
      %78 = arith.mulf %66, %77 : vector<16x1xf32>
      %79 = arith.addf %73, %78 : vector<16x1xf32>
      %80 = arith.addf %arg10, %71 : vector<16x1xf32>
      %81 = arith.addf %80, %66 : vector<16x1xf32>
      %82 = arith.mulf %55, %71 : vector<16x1xf32>
      %83 = arith.mulf %66, %77 : vector<16x1xf32>
      %84 = arith.addf %82, %83 : vector<16x1xf32>
      %85 = vector.extract_strided_slice %43 {offsets = [1, 0], sizes = [1, 32], strides = [1, 1]} : vector<8x128xf32> to vector<1x32xf32>
      %86 = vector.extract_strided_slice %43 {offsets = [1, 32], sizes = [1, 32], strides = [1, 1]} : vector<8x128xf32> to vector<1x32xf32>
      %cst_27 = arith.constant dense<0.000000e+00> : vector<16xf32>
      %87 = vector.multi_reduction <add>, %42, %cst_27 [1] : vector<16x32xf32> to vector<16xf32>
      %88 = vector.shape_cast %87 : vector<16xf32> to vector<16x1xf32>
      %cst_28 = arith.constant 3.200000e+01 : f32
      %89 = vector.broadcast %cst_28 : f32 to vector<16x1xf32>
      %90 = arith.divf %88, %89 : vector<16x1xf32>
      %91 = vector.broadcast %90 : vector<16x1xf32> to vector<16x32xf32>
      %92 = arith.subf %42, %91 : vector<16x32xf32>
      %93 = arith.mulf %92, %92 : vector<16x32xf32>
      %cst_29 = arith.constant dense<0.000000e+00> : vector<16xf32>
      %94 = vector.multi_reduction <add>, %93, %cst_29 [1] : vector<16x32xf32> to vector<16xf32>
      %95 = vector.shape_cast %94 : vector<16xf32> to vector<16x1xf32>
      %cst_30 = arith.constant 3.100000e+01 : f32
      %96 = vector.broadcast %cst_30 : f32 to vector<16x1xf32>
      %97 = arith.divf %95, %96 : vector<16x1xf32>
      %98 = vector.broadcast %85 : vector<1x32xf32> to vector<16x32xf32>
      %99 = arith.mulf %98, %92 : vector<16x32xf32>
      %100 = math.sqrt %97 : vector<16x1xf32>
      %cst_31 = arith.constant 9.99999997E-7 : f32
      %101 = vector.broadcast %cst_31 : f32 to vector<16x1xf32>
      %102 = arith.addf %100, %101 : vector<16x1xf32>
      %103 = vector.broadcast %102 : vector<16x1xf32> to vector<16x32xf32>
      %104 = arith.divf %99, %103 : vector<16x32xf32>
      %105 = vector.broadcast %86 : vector<1x32xf32> to vector<16x32xf32>
      %106 = arith.addf %104, %105 : vector<16x32xf32>
      %c0_32 = arith.constant 0 : index
      %c0_33 = arith.constant 0 : index
      %107 = vector.load %arg1[%c0_32, %c0_33] : memref<128x128xbf16, #tpu.memory_space<vmem>>, vector<32x128xbf16>
      %108 = arith.truncf %106 : vector<16x32xf32> to vector<16x32xbf16>
      %109 = vector.extract_strided_slice %107 {offsets = [0, 32], sizes = [32, 96], strides = [1, 1]} : vector<32x128xbf16> to vector<32x96xbf16>
      %cst_34 = arith.constant dense<0.000000e+00> : vector<16x96xf32>
      %110 = tpu.matmul %108, %109, %cst_34 {dimension_numbers = #tpu.dot_dimension_numbers<[1], [0], [0], [1], [0, 0, 1, 1], [], []>} : vector<16x32xbf16>, vector<32x96xbf16>, vector<16x96xf32> -> vector<16x96xf32>
      %111 = vector.shape_cast %110 : vector<16x96xf32> to vector<2x8x96xf32>
      %112 = vector.extract_strided_slice %111 {offsets = [0, 0, 0], sizes = [2, 8, 16], strides = [1, 1, 1]} : vector<2x8x96xf32> to vector<2x8x16xf32>
      %113 = vector.extract_strided_slice %111 {offsets = [0, 0, 16], sizes = [2, 8, 16], strides = [1, 1, 1]} : vector<2x8x96xf32> to vector<2x8x16xf32>
      %114 = tpu.concatenate %112, %113 in 0 : vector<2x8x16xf32>, vector<2x8x16xf32> -> vector<4x8x16xf32>
      %115 = vector.extract_strided_slice %111 {offsets = [0, 0, 32], sizes = [2, 8, 16], strides = [1, 1, 1]} : vector<2x8x96xf32> to vector<2x8x16xf32>
      %116 = vector.extract_strided_slice %111 {offsets = [0, 0, 48], sizes = [2, 8, 16], strides = [1, 1, 1]} : vector<2x8x96xf32> to vector<2x8x16xf32>
      %117 = tpu.concatenate %115, %116 in 0 : vector<2x8x16xf32>, vector<2x8x16xf32> -> vector<4x8x16xf32>
      %118 = vector.extract_strided_slice %111 {offsets = [0, 0, 64], sizes = [2, 8, 16], strides = [1, 1, 1]} : vector<2x8x96xf32> to vector<2x8x16xf32>
      %119 = vector.extract_strided_slice %111 {offsets = [0, 0, 80], sizes = [2, 8, 16], strides = [1, 1, 1]} : vector<2x8x96xf32> to vector<2x8x16xf32>
      %120 = tpu.concatenate %118, %119 in 0 : vector<2x8x16xf32>, vector<2x8x16xf32> -> vector<4x8x16xf32>
      "tpu.trace_start"() <{level = 10 : i32, message = "bqd,bkd->bqk"}> : () -> ()
      %cst_35 = arith.constant dense<0.000000e+00> : vector<4x8x8xf32>
      %121 = tpu.matmul %114, %117, %cst_35 {dimension_numbers = #tpu.dot_dimension_numbers<[2], [2], [1], [1], [0, 0, 0, 1, 1, 1], [0], [0]>} : vector<4x8x16xf32>, vector<4x8x16xf32>, vector<4x8x8xf32> -> vector<4x8x8xf32>
      "tpu.trace_stop"() : () -> ()
      %cst_36 = arith.constant dense<0xFF800000> : vector<4x8xf32>
      %122 = vector.multi_reduction <maximumf>, %121, %cst_36 [2] : vector<4x8x8xf32> to vector<4x8xf32>
      %123 = vector.shape_cast %122 : vector<4x8xf32> to vector<4x8x1xf32>
      %124 = vector.broadcast %123 : vector<4x8x1xf32> to vector<4x8x8xf32>
      %125 = arith.subf %121, %124 : vector<4x8x8xf32>
      %126 = math.exp %125 : vector<4x8x8xf32>
      %cst_37 = arith.constant dense<0.000000e+00> : vector<4x8xf32>
      %127 = vector.multi_reduction <add>, %126, %cst_37 [2] : vector<4x8x8xf32> to vector<4x8xf32>
      %128 = vector.shape_cast %127 : vector<4x8xf32> to vector<4x8x1xf32>
      %129 = tpu.reciprocal %128 {approx = true} : vector<4x8x1xf32> -> vector<4x8x1xf32>
      %130 = vector.broadcast %129 : vector<4x8x1xf32> to vector<4x8x8xf32>
      %131 = arith.mulf %126, %130 : vector<4x8x8xf32>
      "tpu.trace_start"() <{level = 10 : i32, message = "bqk,bkd->bqd"}> : () -> ()
      %cst_38 = arith.constant dense<0.000000e+00> : vector<4x8x16xf32>
      %132 = tpu.matmul %131, %120, %cst_38 {dimension_numbers = #tpu.dot_dimension_numbers<[2], [1], [1], [2], [0, 0, 0, 1, 1, 2], [0], [0]>} : vector<4x8x8xf32>, vector<4x8x16xf32>, vector<4x8x16xf32> -> vector<4x8x16xf32>
      "tpu.trace_stop"() : () -> ()
      %133 = vector.extract_strided_slice %132 {offsets = [0, 0, 0], sizes = [2, 8, 16], strides = [1, 1, 1]} : vector<4x8x16xf32> to vector<2x8x16xf32>
      %134 = vector.shape_cast %133 : vector<2x8x16xf32> to vector<16x16xf32>
      %135 = vector.extract_strided_slice %132 {offsets = [2, 0, 0], sizes = [2, 8, 16], strides = [1, 1, 1]} : vector<4x8x16xf32> to vector<2x8x16xf32>
      %136 = vector.shape_cast %135 : vector<2x8x16xf32> to vector<16x16xf32>
      %137 = tpu.concatenate %134, %136 in 1 : vector<16x16xf32>, vector<16x16xf32> -> vector<16x32xf32>
      %c32 = arith.constant 32 : index
      %c0_39 = arith.constant 0 : index
      %138 = vector.load %arg1[%c32, %c0_39] : memref<128x128xbf16, #tpu.memory_space<vmem>>, vector<32x128xbf16>
      %139 = arith.truncf %137 : vector<16x32xf32> to vector<16x32xbf16>
      %140 = vector.extract_strided_slice %138 {offsets = [0, 0], sizes = [32, 32], strides = [1, 1]} : vector<32x128xbf16> to vector<32x32xbf16>
      %cst_40 = arith.constant dense<0.000000e+00> : vector<16x32xf32>
      %141 = tpu.matmul %139, %140, %cst_40 {dimension_numbers = #tpu.dot_dimension_numbers<[1], [0], [0], [1], [0, 0, 1, 1], [], []>} : vector<16x32xbf16>, vector<32x32xbf16>, vector<16x32xf32> -> vector<16x32xf32>
      %142 = arith.addf %42, %141 : vector<16x32xf32>
      %143 = vector.extract_strided_slice %43 {offsets = [1, 64], sizes = [1, 32], strides = [1, 1]} : vector<8x128xf32> to vector<1x32xf32>
      %144 = vector.extract_strided_slice %43 {offsets = [1, 96], sizes = [1, 32], strides = [1, 1]} : vector<8x128xf32> to vector<1x32xf32>
      %cst_41 = arith.constant dense<0.000000e+00> : vector<16xf32>
      %145 = vector.multi_reduction <add>, %142, %cst_41 [1] : vector<16x32xf32> to vector<16xf32>
      %146 = vector.shape_cast %145 : vector<16xf32> to vector<16x1xf32>
      %cst_42 = arith.constant 3.200000e+01 : f32
      %147 = vector.broadcast %cst_42 : f32 to vector<16x1xf32>
      %148 = arith.divf %146, %147 : vector<16x1xf32>
      %149 = vector.broadcast %148 : vector<16x1xf32> to vector<16x32xf32>
      %150 = arith.subf %142, %149 : vector<16x32xf32>
      %151 = arith.mulf %150, %150 : vector<16x32xf32>
      %cst_43 = arith.constant dense<0.000000e+00> : vector<16xf32>
      %152 = vector.multi_reduction <add>, %151, %cst_43 [1] : vector<16x32xf32> to vector<16xf32>
      %153 = vector.shape_cast %152 : vector<16xf32> to vector<16x1xf32>
      %cst_44 = arith.constant 3.100000e+01 : f32
      %154 = vector.broadcast %cst_44 : f32 to vector<16x1xf32>
      %155 = arith.divf %153, %154 : vector<16x1xf32>
      %156 = vector.broadcast %143 : vector<1x32xf32> to vector<16x32xf32>
      %157 = arith.mulf %156, %150 : vector<16x32xf32>
      %158 = math.sqrt %155 : vector<16x1xf32>
      %cst_45 = arith.constant 9.99999997E-7 : f32
      %159 = vector.broadcast %cst_45 : f32 to vector<16x1xf32>
      %160 = arith.addf %158, %159 : vector<16x1xf32>
      %161 = vector.broadcast %160 : vector<16x1xf32> to vector<16x32xf32>
      %162 = arith.divf %157, %161 : vector<16x32xf32>
      %163 = vector.broadcast %144 : vector<1x32xf32> to vector<16x32xf32>
      %164 = arith.addf %162, %163 : vector<16x32xf32>
      %165 = arith.truncf %164 : vector<16x32xf32> to vector<16x32xbf16>
      %166 = vector.extract_strided_slice %138 {offsets = [0, 32], sizes = [32, 64], strides = [1, 1]} : vector<32x128xbf16> to vector<32x64xbf16>
      %cst_46 = arith.constant dense<0.000000e+00> : vector<16x64xf32>
      %167 = tpu.matmul %165, %166, %cst_46 {dimension_numbers = #tpu.dot_dimension_numbers<[1], [0], [0], [1], [0, 0, 1, 1], [], []>} : vector<16x32xbf16>, vector<32x64xbf16>, vector<16x64xf32> -> vector<16x64xf32>
      %168 = vector.extract_strided_slice %43 {offsets = [3, 0], sizes = [1, 64], strides = [1, 1]} : vector<8x128xf32> to vector<1x64xf32>
      %169 = vector.broadcast %168 : vector<1x64xf32> to vector<16x64xf32>
      %170 = arith.addf %167, %169 : vector<16x64xf32>
      %cst_47 = arith.constant 0.000000e+00 : f32
      %171 = vector.broadcast %cst_47 : f32 to vector<16x64xf32>
      %172 = arith.maximumf %170, %171 : vector<16x64xf32>
      %c64 = arith.constant 64 : index
      %c0_48 = arith.constant 0 : index
      %173 = vector.load %arg1[%c64, %c0_48] : memref<128x128xbf16, #tpu.memory_space<vmem>>, vector<64x128xbf16>
      %174 = arith.truncf %172 : vector<16x64xf32> to vector<16x64xbf16>
      %175 = vector.extract_strided_slice %173 {offsets = [0, 0], sizes = [64, 32], strides = [1, 1]} : vector<64x128xbf16> to vector<64x32xbf16>
      %cst_49 = arith.constant dense<0.000000e+00> : vector<16x32xf32>
      %176 = tpu.matmul %174, %175, %cst_49 {dimension_numbers = #tpu.dot_dimension_numbers<[1], [0], [0], [1], [0, 0, 1, 1], [], []>} : vector<16x64xbf16>, vector<64x32xbf16>, vector<16x32xf32> -> vector<16x32xf32>
      %177 = vector.extract_strided_slice %43 {offsets = [2, 64], sizes = [1, 32], strides = [1, 1]} : vector<8x128xf32> to vector<1x32xf32>
      %178 = vector.broadcast %177 : vector<1x32xf32> to vector<16x32xf32>
      %179 = arith.addf %176, %178 : vector<16x32xf32>
      %180 = arith.addf %142, %179 : vector<16x32xf32>
      %181 = vector.broadcast %84 : vector<16x1xf32> to vector<16x32xf32>
      %182 = arith.mulf %180, %181 : vector<16x32xf32>
      %cst_50 = arith.constant 1.000000e+00 : f32
      %183 = vector.broadcast %cst_50 : f32 to vector<16x1xf32>
      %184 = arith.subf %183, %84 : vector<16x1xf32>
      %185 = vector.broadcast %184 : vector<16x1xf32> to vector<16x32xf32>
      %186 = arith.mulf %arg7, %185 : vector<16x32xf32>
      %187 = arith.addf %182, %186 : vector<16x32xf32>
      scf.yield %180, %187, %79, %77, %81 : vector<16x32xf32>, vector<16x32xf32>, vector<16x1xf32>, vector<16x1xf32>, vector<16x1xf32>
    }
    %c3_i32_7 = arith.constant 3 : i32
    %c0_8 = arith.constant 0 : index
    %c0_9 = arith.constant 0 : index
    %10 = vector.load %arg2[%c0_8, %c0_9] : memref<56x128xf32, #tpu.memory_space<vmem>>, vector<8x128xf32>
    %11 = vector.extract_strided_slice %10 {offsets = [2, 0], sizes = [1, 32], strides = [1, 1]} : vector<8x128xf32> to vector<1x32xf32>
    %12 = vector.extract_strided_slice %10 {offsets = [2, 32], sizes = [1, 32], strides = [1, 1]} : vector<8x128xf32> to vector<1x32xf32>
    %cst_10 = arith.constant dense<0.000000e+00> : vector<16xf32>
    %13 = vector.multi_reduction <add>, %9#1, %cst_10 [1] : vector<16x32xf32> to vector<16xf32>
    %14 = vector.shape_cast %13 : vector<16xf32> to vector<16x1xf32>
    %cst_11 = arith.constant 3.200000e+01 : f32
    %15 = vector.broadcast %cst_11 : f32 to vector<16x1xf32>
    %16 = arith.divf %14, %15 : vector<16x1xf32>
    %17 = vector.broadcast %16 : vector<16x1xf32> to vector<16x32xf32>
    %18 = arith.subf %9#1, %17 : vector<16x32xf32>
    %19 = arith.mulf %18, %18 : vector<16x32xf32>
    %cst_12 = arith.constant dense<0.000000e+00> : vector<16xf32>
    %20 = vector.multi_reduction <add>, %19, %cst_12 [1] : vector<16x32xf32> to vector<16xf32>
    %21 = vector.shape_cast %20 : vector<16xf32> to vector<16x1xf32>
    %cst_13 = arith.constant 3.100000e+01 : f32
    %22 = vector.broadcast %cst_13 : f32 to vector<16x1xf32>
    %23 = arith.divf %21, %22 : vector<16x1xf32>
    %24 = vector.broadcast %11 : vector<1x32xf32> to vector<16x32xf32>
    %25 = arith.mulf %24, %18 : vector<16x32xf32>
    %26 = math.sqrt %23 : vector<16x1xf32>
    %cst_14 = arith.constant 9.99999997E-7 : f32
    %27 = vector.broadcast %cst_14 : f32 to vector<16x1xf32>
    %28 = arith.addf %26, %27 : vector<16x1xf32>
    %29 = vector.broadcast %28 : vector<16x1xf32> to vector<16x32xf32>
    %30 = arith.divf %25, %29 : vector<16x32xf32>
    %31 = vector.broadcast %12 : vector<1x32xf32> to vector<16x32xf32>
    %32 = arith.addf %30, %31 : vector<16x32xf32>
    %cst_15 = arith.constant 0.000000e+00 : f32
    %33 = vector.broadcast %cst_15 : f32 to vector<16x94xf32>
    %34 = tpu.concatenate %32, %9#3, %9#4, %33 in 1 : vector<16x32xf32>, vector<16x1xf32>, vector<16x1xf32>, vector<16x94xf32> -> vector<16x128xf32>
    %c0_16 = arith.constant 0 : index
    %c0_17 = arith.constant 0 : index
    %35 = vector.load %arg4[%c0_16, %c0_17] : memref<16x128xf32, #tpu.memory_space<vmem>>, vector<16x128xf32>
    tpu.vector_store %arg4[%c0_16, %c0_17], %34 {strides = array<i32>} : memref<16x128xf32, #tpu.memory_space<vmem>>, vector<16x128xf32>,
    return
  }
}

</mosaic_0001>

<llo_original>
// kernel: squeeze.3
$region0: #{squeeze.3}
  %s0 = inlined_call_operand.vmem [shape: f32[16], index: 0, kind: input, shape index: {}]
  %s1 = inlined_call_operand.hbm [shape: f32[2,8], index: 1, kind: output, shape index: {}]
  $region1: #{squeeze.3} parent=0
    #allocation0 [shape = 'u8[1024]{0}', space=vmem, size = 0x400, scoped, tag = 'operand span for operand 1']
    #allocation1 [shape = 's32[1]{0}', space=sflag, size = 0x4, scoped, tag = 'scoped memory for squeeze.3']
    #allocation2 [shape = 'u8[4096]{0}', space=vmem, size = 0x1000, scoped, tag = 'scoped mem for output reshape']
    #allocation3 [shape = 'u8[4096]{0}', space=vmem, size = 0x1000, scoped, tag = 'scoped mem for input reshape']
    %2 = vsyncpa [#allocation1], 0
    %s4 = ssub.s32 2, 1
    %v5 = vld [vmem:[%s0] sm:%s4]
    %6 = vst [vmem:[#allocation3] sm:%s4] %v5
    %v7 = vld [vmem:[#allocation3] sm:$0x1]
    %vm8 = vcmask 64512
    %9 = vst.msk [vmem:[#allocation2] sm:$0x1] %vm8, %v7
    %v10 = vld [vmem:[#allocation3] sm:$0x1]
    %11 = vrot.lane.b32.xlu0 %v10, 120
    %v12 = vpop.permute.xlu0 %11
    %vm13 = vcmask 64512
    %s14 = scalar_lea.vmem [#allocation2], 1
    %15 = vst.msk [vmem:[%s14] sm:$0x1] %vm13, %v12
    %s17 = ssub.s32 4, 1
    %v18 = vld [vmem:[#allocation2] sm:%s17]
    %s20 = ssub.s32 4, 1
    %21 = vst [vmem:[#allocation0] sm:%s20] %v18
    %23 = vsyncadd [#allocation1], 0
    %s25 = sshll.u32 [#allocation0], 4
    %s26 = int_to_ptr.vmem [resolvable:$true] %s25
    %s27 = sshll.u32 %s1, 4
    %s28 = int_to_ptr.hbm [resolvable:$true] %s27
    %30 = dma.vmem_to_hbm [thread:$0]  %s26, 32, %s28, [#allocation1]
    %32 = dma.done [#allocation1], 32
    %33 = vsyncpa [#allocation1], 1

// kernel: encoder_forward.1
$region0: #{encoder_forward.1}
  #allocation0 [shape = 'u32[]', space=smem, size = 0x4, offset = 0x4, fixed_abs, tag = 'smem constant byte address 0x4 - core index']
  #allocation1 [shape = 'u32[72,128]{1,0:T(1,128)}', space=vmem, size = 0x9000, scoped, tag = 'internal scratch']
  #allocation2 [shape = 'f32[1,1]{1,0:T(1,128)S(6)}', space=smem, size = 0x200, scoped, tag = 'scoped memory for encoder_forward.1']
  %s0 = inlined_call_operand.hbm [shape: f32[16,32], index: 0, kind: input, shape index: {}]
  %s1 = inlined_call_operand.hbm [shape: bf16[128,128], index: 1, kind: input, shape index: {}]
  %s2 = inlined_call_operand.hbm [shape: f32[56,128], index: 2, kind: input, shape index: {}]
  %s3 = inlined_call_operand.<no memory space> [shape: f32[1,1], index: 3, kind: input, shape index: {}]
  %s4 = inlined_call_operand.vmem [shape: f32[16,128], index: 4, kind: output, shape index: {}]
  %s5 = sld [smem:[#allocation0]]
  $region45: #{encoder_forward.1} parent=0
    _
  %s7 = ssub.s32 1, %s5
  %s8 = scalar_select 0, %s7, %s5
  %9 = sst [smem:[#allocation2]] %s3
  $region1: #{encoder_forward.1} parent=0
    #allocation3 [shape = 'u8[8192]{0}', space=vmem, size = 0x2000, scoped, tag = 'input window, operand 0, single buffered']
    #allocation4 [shape = 's32[1]{0}', space=sflag, size = 0x4, scoped, tag = 'scoped memory for encoder_forward.1']
    #allocation5 [shape = 'u8[32768]{0}', space=vmem, size = 0x8000, scoped, tag = 'input window, operand 1, single buffered']
    #allocation6 [shape = 's32[1]{0}', space=sflag, size = 0x4, scoped, tag = 'scoped memory for encoder_forward.1']
    #allocation7 [shape = 'u8[28672]{0}', space=vmem, size = 0x7000, scoped, tag = 'input window, operand 2, single buffered']
    %10 = vsyncpa [#allocation4], 0
    %11 = vsyncpa [#allocation6], 0
    // Predicated region
    $region2: #{encoder_forward.1} parent=1 // pred_check
      _
    $region3: #{encoder_forward.1} parent=1 // pred_check_branch
      %13 = sbr.rel (0) target = $region5
    $region4: #{encoder_forward.1} parent=1 // pred_region
      %15 = vsyncadd [#allocation4], 0
      %s16 = sshll.u32 %s0, 4
      %s17 = int_to_ptr.hbm [resolvable:$true] %s16
      %s18 = sshll.u32 [#allocation3], 4
      %s19 = int_to_ptr.vmem [resolvable:$true] %s18
      %24 = dma.hbm_to_vmem [thread:$0]  %s17, 256, %s19, [#allocation4], 128, 128, 8
    $region5: #{encoder_forward.1} parent=1 // pred_fallthru
      _
    // Predicated region
    $region6: #{encoder_forward.1} parent=1 // pred_check
      _
    $region7: #{encoder_forward.1} parent=1 // pred_check_branch
      %26 = sbr.rel (0) target = $region9
    $region8: #{encoder_forward.1} parent=1 // pred_region
      %28 = vsyncadd [#allocation6], 0
      %s29 = sshll.u32 %s1, 4
      %s30 = int_to_ptr.hbm [resolvable:$true] %s29
      %s31 = sshll.u32 [#allocation5], 4
      %s32 = int_to_ptr.vmem [resolvable:$true] %s31
      %37 = dma.hbm_to_vmem [thread:$0]  %s30, 1024, %s32, [#allocation6], 64, 64, 4
    $region9: #{encoder_forward.1} parent=1 // pred_fallthru
      _
    // Predicated region
    $region10: #{encoder_forward.1} parent=1 // pred_check
      _
    $region11: #{encoder_forward.1} parent=1 // pred_check_branch
      %39 = sbr.rel (0) target = $region13
    $region12: #{encoder_forward.1} parent=1 // pred_region
      %41 = vsyncadd [#allocation6], 0
      %s42 = sshll.u32 %s2, 4
      %s43 = int_to_ptr.hbm [resolvable:$true] %s42
      %s44 = sshll.u32 [#allocation7], 4
      %s45 = int_to_ptr.vmem [resolvable:$true] %s44
      %50 = dma.hbm_to_vmem [thread:$0]  %s43, 896, %s45, [#allocation6], 128, 128, 8
    $region13: #{encoder_forward.1} parent=1 // pred_fallthru
      _
    // Predicated region
    $region14: #{encoder_forward.1} parent=1 // pred_check
      _
    $region15: #{encoder_forward.1} parent=1 // pred_check_branch
      %52 = sbr.rel (0) target = $region17
    $region16: #{encoder_forward.1} parent=1 // pred_region
      _
    $region17: #{encoder_forward.1} parent=1 // pred_fallthru
      _
    // Predicated region
    $region18: #{encoder_forward.1} parent=1 // pred_check
      _
    $region19: #{encoder_forward.1} parent=1 // pred_check_branch
      %54 = sbr.rel (0) target = $region21
    $region20: #{encoder_forward.1} parent=1 // pred_region
      %56 = dma.done [#allocation4], 256
    $region21: #{encoder_forward.1} parent=1 // pred_fallthru
      _
    // Predicated region
    $region22: #{encoder_forward.1} parent=1 // pred_check
      _
    $region23: #{encoder_forward.1} parent=1 // pred_check_branch
      %58 = sbr.rel (0) target = $region25
    $region24: #{encoder_forward.1} parent=1 // pred_region
      %60 = dma.done [#allocation6], 1024
    $region25: #{encoder_forward.1} parent=1 // pred_fallthru
      _
    // Predicated region
    $region26: #{encoder_forward.1} parent=1 // pred_check
      _
    $region27: #{encoder_forward.1} parent=1 // pred_check_branch
      %62 = sbr.rel (0) target = $region29
    $region28: #{encoder_forward.1} parent=1 // pred_region
      %64 = dma.done [#allocation6], 896
    $region29: #{encoder_forward.1} parent=1 // pred_fallthru
      _
    %s66 = sld [smem:[#allocation2]]
    %v67 = vld [vmem:[#allocation3] sm:$0xff]
    %v68 = vld [vmem:[#allocation3 + $0x8] sm:$0xff]
    %v69 = vpack.c.bf16 %v68, %v67
    %v70 = vld [vmem:[#allocation5] sm:$0xf]
    %v71 = vld [vmem:[#allocation5 + $0x4] sm:$0xf]
    %v72 = vld [vmem:[#allocation5 + $0x8] sm:$0xf]
    %v73 = vld [vmem:[#allocation5 + $0xc] sm:$0xf]
    %v78 = vunpack.c.l.b16 %v70
    %v79 = vunpack.c.l.b16 %v71
    %v80 = vunpack.c.l.b16 %v72
    %v81 = vunpack.c.l.b16 %v73
    %v82 = vpack.c.b16 %v79, %v78
    %v83 = vpack.c.b16 %v81, %v80
    %vm86 = vcmask 261120
    %v88 = vsel %vm86, %v69, 0
    %90 = vmatpush.bf16.msra.mxu0 0
    %91 = vmatpush.bf16.msra.mxu0 0
    %92 = vmatpush.bf16.msra.mxu0 0
    %93 = vmatpush.bf16.msra.mxu0 0
    %94 = vmatpush.bf16.msra.mxu0 0
    %95 = vmatpush.bf16.msra.mxu0 0
    %96 = vmatpush.bf16.msra.mxu0 %v83
    %97 = vmatpush.bf16.msra.mxu0 %v82
    %98 = vmatmul.bf16.gmra.mxu0 %v88
    %v99 = vpop.f32.mrf.mxu0
    %v100 = vadd.f32 0.0, %v99
    %v101 = vpop.f32.mrf.mxu0
    %v102 = vadd.f32 0.0, %v101
    %103 = vdwg.mxu0
    loop: start=0, step=1, limit=3
    $region30: #{encoder_forward.1} parent=1 // loop_pre_header
      _
    $region31: #{encoder_forward.1} parent=1 // loop_header
      %s105 = sphi 0, %s109
      %p106 = scmp.ge.s32.totalorder %s105, 3
      %v110 = vphi %v100, %v841
      %v111 = vphi %v102, %v842
      %v112 = vphi 0.0, %v849
      %v113 = vphi 0.0, %v850
      %v114 = vphi 0.0, %v216
      %v115 = vphi 0.0, %v217
      %v116 = vphi 0.0, %v212
      %v117 = vphi 0.0, %v213
      %v118 = vphi 0.0, %v220
      %v119 = vphi 0.0, %v221
    $region32: #{encoder_forward.1} parent=1 // loop_header_branch
      %108 = sbr.rel (%p106) target = $region36
    $region33: #{encoder_forward.1} parent=1 // loop_body
      %s120 = smul.u32 %s105, 16
      %s121 = sadd.s32 %s120, 8
      %s122 = scalar_lea.vmem [#allocation7], %s121
      %v123 = vld [vmem:[%s122] sm:$0xff]
      %v124 = vld [vmem:[%s122 + $0x8] sm:$0xff]
      %v125 = vadd.f32 %v110, %v123
      %v126 = vadd.f32 %v111, %v124
      %v127 = vld [vmem:[#allocation7] sm:$0xff]
      %v128 = vperm.slane %v127, 0
      %v129 = vmul.f32 %v125, %v128
      %v130 = vmul.f32 %v126, %v128
      %v131 = vsel %vm86, %v129, 0.0
      %132 = vadd.xlane.f32.xlu0 %v131
      %v133 = vpop.xlane.xlu0 %132
      %v134 = vsel %vm86, %v130, 0.0
      %135 = vadd.xlane.f32.xlu0 %v134
      %v136 = vpop.xlane.xlu0 %135
      %v137 = vstv %s66
      %v138 = vadd.f32 %v133, %v137
      %v139 = vadd.f32 %v136, %v137
      %v140 = vxor.u32 %v138, 2147483648
      %v141 = vxor.u32 %v139, 2147483648
      %v142 = vmul.f32 %v140, 1.442695
      %v143 = vpow.pop %v142
      %v144 = vmul.f32 %v141, 1.442695
      %v145 = vpow.pop %v144
      %v146 = vadd.f32 %v143, 1.0
      %v147 = vadd.f32 %v145, 1.0
      %v148 = vrcp.pop %v146
      %v149 = vmul.f32 %v146, %v148
      %v150 = vsub.f32 1.0, %v149
      %v151 = vmul.f32 %v148, %v150
      %v152 = vadd.f32 %v148, %v151
      %vm153 = vweird.f32 %v146
      %vm154 = vweird.f32 %v148
      %vm155 = vmor %vm153, %vm154
      %v156 = vsel %vm155, %v148, %v152
      %v157 = vand.u32 2147483647, %v146
      %vm158 = vcmp.eq.f32.partialorder %v157, 8.507059e+37
      %v159 = vand.u32 %v146, 2147483648
      %v160 = vor.u32 1.1754944e-38, %v159
      %v161 = vsel %vm158, %v160, %v156
      %v162 = vmul.f32 1.0, %v161
      %v163 = vrcp.pop %v147
      %v164 = vmul.f32 %v147, %v163
      %v165 = vsub.f32 1.0, %v164
      %v166 = vmul.f32 %v163, %v165
      %v167 = vadd.f32 %v163, %v166
      %vm168 = vweird.f32 %v147
      %vm169 = vweird.f32 %v163
      %vm170 = vmor %vm168, %vm169
      %v171 = vsel %vm170, %v163, %v167
      %v172 = vand.u32 2147483647, %v147
      %vm173 = vcmp.eq.f32.partialorder %v172, 8.507059e+37
      %v174 = vand.u32 %v147, 2147483648
      %v175 = vor.u32 1.1754944e-38, %v174
      %v176 = vsel %vm173, %v175, %v171
      %v177 = vmul.f32 1.0, %v176
      %vm178 = vcmp.lt.f32.partialorder %v114, 1.0
      %vm179 = vcmp.lt.f32.partialorder %v115, 1.0
      %v180 = vsel %vm178, 1, 0
      %v181 = vsel %vm179, 1, 0
      %v182 = vcvt.s32.f32 %v180
      %v183 = vcvt.s32.f32 %v181
      %v184 = vmul.f32 %v162, %v182
      %v185 = vmul.f32 %v177, %v183
      %v186 = vadd.f32 %v114, %v184
      %v187 = vadd.f32 %v115, %v185
      %vm188 = vcmp.gt.f32.partialorder %v186, 0.9
      %vm189 = vcmp.gt.f32.partialorder %v187, 0.9
      %v190 = vsel %vm188, 1, 0
      %v191 = vsel %vm189, 1, 0
      %v192 = vcvt.s32.f32 %v190
      %v193 = vcvt.s32.f32 %v191
      %v194 = vmul.f32 %v192, %v182
      %v195 = vmul.f32 %v193, %v183
      %vm196 = vcmp.le.f32.partialorder %v186, 0.9
      %vm197 = vcmp.le.f32.partialorder %v187, 0.9
      %v198 = vsel %vm196, 1, 0
      %v199 = vsel %vm197, 1, 0
      %v200 = vcvt.s32.f32 %v198
      %v201 = vcvt.s32.f32 %v199
      %v202 = vmul.f32 %v200, %v182
      %v203 = vmul.f32 %v201, %v183
      %v204 = vmul.f32 %v162, %v202
      %v205 = vmul.f32 %v177, %v203
      %v206 = vadd.f32 %v114, %v204
      %v207 = vadd.f32 %v115, %v205
      %v208 = vsub.f32 1.0, %v206
      %v209 = vsub.f32 1.0, %v207
      %v210 = vmul.f32 %v194, %v208
      %v211 = vmul.f32 %v195, %v209
      %v212 = vadd.f32 %v116, %v210
      %v213 = vadd.f32 %v117, %v211
      %v214 = vmul.f32 %v194, %v212
      %v215 = vmul.f32 %v195, %v213
      %v216 = vadd.f32 %v206, %v214
      %v217 = vadd.f32 %v207, %v215
      %v218 = vadd.f32 %v118, %v202
      %v219 = vadd.f32 %v119, %v203
      %v220 = vadd.f32 %v218, %v194
      %v221 = vadd.f32 %v219, %v195
      %v222 = vadd.f32 %v204, %v214
      %v223 = vadd.f32 %v205, %v215
      %v224 = vsel %vm86, %v125, 0.0
      %225 = vadd.xlane.f32.xlu0 %v224
      %v226 = vpop.xlane.xlu0 %225
      %v227 = vsel %vm86, %v126, 0.0
      %228 = vadd.xlane.f32.xlu0 %v227
      %v229 = vpop.xlane.xlu0 %228
      %v230 = vrcp.pop 32.0
      %v231 = vmul.f32 32.0, %v230
      %v232 = vsub.f32 1.0, %v231
      %v233 = vmul.f32 %v230, %v232
      %v234 = vadd.f32 %v230, %v233
      %vm235 = vweird.f32 %v230
      %v236 = vsel %vm235, %v230, %v234
      %v237 = vmul.f32 %v226, %v236
      %v238 = vmul.f32 %v229, %v236
      %v239 = vsub.f32 %v125, %v237
      %v240 = vsub.f32 %v126, %v238
      %v241 = vmul.f32 %v239, %v239
      %v242 = vmul.f32 %v240, %v240
      %v243 = vsel %vm86, %v241, 0.0
      %244 = vadd.xlane.f32.xlu0 %v243
      %v245 = vpop.xlane.xlu0 %244
      %v246 = vsel %vm86, %v242, 0.0
      %247 = vadd.xlane.f32.xlu0 %v246
      %v248 = vpop.xlane.xlu0 %247
      %v249 = vrcp.pop 31.0
      %v250 = vmul.f32 31.0, %v249
      %v251 = vsub.f32 1.0, %v250
      %v252 = vmul.f32 %v249, %v251
      %v253 = vadd.f32 %v249, %v252
      %vm254 = vweird.f32 %v249
      %v255 = vsel %vm254, %v249, %v253
      %v256 = vmul.f32 %v245, %v255
      %v257 = vmul.f32 %v248, %v255
      %v258 = vperm.slane %v127, 1
      %v259 = vmul.f32 %v258, %v239
      %v260 = vmul.f32 %v258, %v240
      %v261 = vrsqrt.pop %v256
      %v262 = vmul.f32 %v261, %v256
      %v263 = vmul.f32 %v262, %v261
      %v264 = vmul.f32 0.5, %v263
      %v265 = vsub.f32 1.5, %v264
      %v266 = vmul.f32 %v261, %v265
      %v267 = vmul.f32 %v256, %v266
      %vm268 = vcmp.eq.f32.partialorder %v256, inf
      %v269 = vsel %vm268, %v256, %v267
      %vm270 = vcmp.eq.f32.partialorder %v256, 0.0
      %v271 = vand.u32 %v256, 2147483648
      %v272 = vsel %vm270, %v271, %v269
      %v273 = vrsqrt.pop %v257
      %v274 = vmul.f32 %v273, %v257
      %v275 = vmul.f32 %v274, %v273
      %v276 = vmul.f32 0.5, %v275
      %v277 = vsub.f32 1.5, %v276
      %v278 = vmul.f32 %v273, %v277
      %v279 = vmul.f32 %v257, %v278
      %vm280 = vcmp.eq.f32.partialorder %v257, inf
      %v281 = vsel %vm280, %v257, %v279
      %vm282 = vcmp.eq.f32.partialorder %v257, 0.0
      %v283 = vand.u32 %v257, 2147483648
      %v284 = vsel %vm282, %v283, %v281
      %v285 = vadd.f32 %v272, 1e-06
      %v286 = vadd.f32 %v284, 1e-06
      %v287 = vrcp.pop %v285
      %v288 = vmul.f32 %v285, %v287
      %v289 = vsub.f32 1.0, %v288
      %v290 = vmul.f32 %v287, %v289
      %v291 = vadd.f32 %v287, %v290
      %vm292 = vweird.f32 %v285
      %vm293 = vweird.f32 %v287
      %vm294 = vmor %vm292, %vm293
      %v295 = vsel %vm294, %v287, %v291
      %v296 = vand.u32 2147483647, %v285
      %vm297 = vcmp.eq.f32.partialorder %v296, 8.507059e+37
      %v298 = vand.u32 %v285, 2147483648
      %v299 = vor.u32 1.1754944e-38, %v298
      %v300 = vsel %vm297, %v299, %v295
      %v301 = vmul.f32 %v259, %v300
      %v302 = vrcp.pop %v286
      %v303 = vmul.f32 %v286, %v302
      %v304 = vsub.f32 1.0, %v303
      %v305 = vmul.f32 %v302, %v304
      %v306 = vadd.f32 %v302, %v305
      %vm307 = vweird.f32 %v286
      %vm308 = vweird.f32 %v302
      %vm309 = vmor %vm307, %vm308
      %v310 = vsel %vm309, %v302, %v306
      %v311 = vand.u32 2147483647, %v286
      %vm312 = vcmp.eq.f32.partialorder %v311, 8.507059e+37
      %v313 = vand.u32 %v286, 2147483648
      %v314 = vor.u32 1.1754944e-38, %v313
      %v315 = vsel %vm312, %v314, %v310
      %v316 = vmul.f32 %v260, %v315
      %318 = vrot.lane.b32.xlu0 %v258, 96
      %v319 = vpop.permute.xlu0 %318
      %v321 = vadd.f32 %v301, %v319
      %v322 = vadd.f32 %v316, %v319
      %v323 = vld [vmem:[#allocation5] sm:$0xf]
      %v324 = vld [vmem:[#allocation5 + $0x4] sm:$0xf]
      %v325 = vld [vmem:[#allocation5 + $0x8] sm:$0xf]
      %v326 = vld [vmem:[#allocation5 + $0xc] sm:$0xf]
      %v327 = vpack.c.bf16 %v322, %v321
      %v332 = vunpack.c.l.b16 %v323
      %v333 = vunpack.c.l.b16 %v324
      %v334 = vunpack.c.l.b16 %v325
      %v335 = vunpack.c.l.b16 %v326
      %v336 = vpack.c.b16 %v333, %v332
      %v337 = vpack.c.b16 %v335, %v334
      %338 = vrot.lane.b32.xlu0 %v336, 96
      %v339 = vpop.permute.xlu0 %338
      %340 = vrot.lane.b32.xlu0 %v337, 96
      %v341 = vpop.permute.xlu0 %340
      %v345 = vsel %vm86, %v327, 0
      %347 = vmatpush.bf16.msra.mxu0 0
      %348 = vmatpush.bf16.msra.mxu0 0
      %349 = vmatpush.bf16.msra.mxu0 0
      %350 = vmatpush.bf16.msra.mxu0 0
      %351 = vmatpush.bf16.msra.mxu0 0
      %352 = vmatpush.bf16.msra.mxu0 0
      %353 = vmatpush.bf16.msra.mxu0 %v341
      %354 = vmatpush.bf16.msra.mxu0 %v339
      %355 = vmatmul.bf16.gmra.mxu0 %v345
      %v356 = vpop.f32.mrf.mxu0
      %v357 = vadd.f32 0.0, %v356
      %v358 = vpop.f32.mrf.mxu0
      %v359 = vadd.f32 0.0, %v358
      %360 = vdwg.mxu0
      %363 = vrot.lane.b32.xlu0 %v357, 112
      %v364 = vpop.permute.xlu0 %363
      %365 = vrot.lane.b32.xlu0 %v359, 112
      %v366 = vpop.permute.xlu0 %365
      %367 = vrot.lane.b32.xlu0 %v357, 96
      %v368 = vpop.permute.xlu0 %367
      %vm369 = vcmask 130048
      %v370 = vsel %vm369, %v357, 0
      %v372 = vsel %vm369, %v368, 0
      %374 = vmatpush.xpose.msra.mxu0 0.0
      %375 = vmatpush.xpose.msra.mxu0 0.0
      %376 = vmatpush.xpose.msra.mxu0 0.0
      %377 = vmatpush.xpose.msra.mxu0 0.0
      %378 = vmatpush.xpose.msra.mxu0 0.0
      %379 = vmatpush.xpose.msra.mxu0 0.0
      %380 = vmatpush.xpose.msra.mxu0 0.0
      %381 = vmatpush.xpose.msra.mxu0 0.0
      %382 = vmatpush.xpose.msra.mxu0 0.0
      %383 = vmatpush.xpose.msra.mxu0 0.0
      %384 = vmatpush.xpose.msra.mxu0 0.0
      %385 = vmatpush.xpose.msra.mxu0 0.0
      %386 = vmatpush.xpose.msra.mxu0 0.0
      %387 = vmatpush.xpose.msra.mxu0 0.0
      %388 = vmatpush.xpose.msra.mxu0 0.0
      %389 = vmatpush.xpose.msra.mxu0 %v372
      %390 = vmatmul.f32.gmra.mxu0 %v370
      %v391 = vpop.f32.mrf.mxu0
      %v392 = vadd.f32 0.0, %v391
      %393 = vdwg.mxu0
      %394 = vrot.lane.b32.xlu0 %v359, 96
      %v395 = vpop.permute.xlu0 %394
      %v396 = vsel %vm369, %v359, 0
      %v398 = vsel %vm369, %v395, 0
      %400 = vmatpush.xpose.msra.mxu0 0.0
      %401 = vmatpush.xpose.msra.mxu0 0.0
      %402 = vmatpush.xpose.msra.mxu0 0.0
      %403 = vmatpush.xpose.msra.mxu0 0.0
      %404 = vmatpush.xpose.msra.mxu0 0.0
      %405 = vmatpush.xpose.msra.mxu0 0.0
      %406 = vmatpush.xpose.msra.mxu0 0.0
      %407 = vmatpush.xpose.msra.mxu0 0.0
      %408 = vmatpush.xpose.msra.mxu0 0.0
      %409 = vmatpush.xpose.msra.mxu0 0.0
      %410 = vmatpush.xpose.msra.mxu0 0.0
      %411 = vmatpush.xpose.msra.mxu0 0.0
      %412 = vmatpush.xpose.msra.mxu0 0.0
      %413 = vmatpush.xpose.msra.mxu0 0.0
      %414 = vmatpush.xpose.msra.mxu0 0.0
      %415 = vmatpush.xpose.msra.mxu0 %v398
      %416 = vmatmul.f32.gmra.mxu0 %v396
      %v417 = vpop.f32.mrf.mxu0
      %v418 = vadd.f32 0.0, %v417
      %419 = vdwg.mxu0
      %420 = vrot.lane.b32.xlu0 %v364, 96
      %v421 = vpop.permute.xlu0 %420
      %v422 = vsel %vm369, %v364, 0
      %v424 = vsel %vm369, %v421, 0
      %426 = vmatpush.xpose.msra.mxu0 0.0
      %427 = vmatpush.xpose.msra.mxu0 0.0
      %428 = vmatpush.xpose.msra.mxu0 0.0
      %429 = vmatpush.xpose.msra.mxu0 0.0
      %430 = vmatpush.xpose.msra.mxu0 0.0
      %431 = vmatpush.xpose.msra.mxu0 0.0
      %432 = vmatpush.xpose.msra.mxu0 0.0
      %433 = vmatpush.xpose.msra.mxu0 0.0
      %434 = vmatpush.xpose.msra.mxu0 0.0
      %435 = vmatpush.xpose.msra.mxu0 0.0
      %436 = vmatpush.xpose.msra.mxu0 0.0
      %437 = vmatpush.xpose.msra.mxu0 0.0
      %438 = vmatpush.xpose.msra.mxu0 0.0
      %439 = vmatpush.xpose.msra.mxu0 0.0
      %440 = vmatpush.xpose.msra.mxu0 0.0
      %441 = vmatpush.xpose.msra.mxu0 %v424
      %442 = vmatmul.f32.gmra.mxu0 %v422
      %v443 = vpop.f32.mrf.mxu0
      %v444 = vadd.f32 0.0, %v443
      %445 = vdwg.mxu0
      %446 = vrot.lane.b32.xlu0 %v366, 96
      %v447 = vpop.permute.xlu0 %446
      %v448 = vsel %vm369, %v366, 0
      %v450 = vsel %vm369, %v447, 0
      %452 = vmatpush.xpose.msra.mxu0 0.0
      %453 = vmatpush.xpose.msra.mxu0 0.0
      %454 = vmatpush.xpose.msra.mxu0 0.0
      %455 = vmatpush.xpose.msra.mxu0 0.0
      %456 = vmatpush.xpose.msra.mxu0 0.0
      %457 = vmatpush.xpose.msra.mxu0 0.0
      %458 = vmatpush.xpose.msra.mxu0 0.0
      %459 = vmatpush.xpose.msra.mxu0 0.0
      %460 = vmatpush.xpose.msra.mxu0 0.0
      %461 = vmatpush.xpose.msra.mxu0 0.0
      %462 = vmatpush.xpose.msra.mxu0 0.0
      %463 = vmatpush.xpose.msra.mxu0 0.0
      %464 = vmatpush.xpose.msra.mxu0 0.0
      %465 = vmatpush.xpose.msra.mxu0 0.0
      %466 = vmatpush.xpose.msra.mxu0 0.0
      %467 = vmatpush.xpose.msra.mxu0 %v450
      %468 = vmatmul.f32.gmra.mxu0 %v448
      %v469 = vpop.f32.mrf.mxu0
      %v470 = vadd.f32 0.0, %v469
      %471 = vdwg.mxu0
      %vm472 = vcmask 64512
      %v473 = vsel %vm472, %v392, -inf
      %474 = vmax.xlane.f32.xlu0 %v473
      %v475 = vpop.xlane.xlu0 %474
      %v476 = vsel %vm472, %v418, -inf
      %477 = vmax.xlane.f32.xlu0 %v476
      %v478 = vpop.xlane.xlu0 %477
      %v479 = vsel %vm472, %v444, -inf
      %480 = vmax.xlane.f32.xlu0 %v479
      %v481 = vpop.xlane.xlu0 %480
      %v482 = vsel %vm472, %v470, -inf
      %483 = vmax.xlane.f32.xlu0 %v482
      %v484 = vpop.xlane.xlu0 %483
      %v485 = vsub.f32 %v392, %v475
      %v486 = vsub.f32 %v418, %v478
      %v487 = vsub.f32 %v444, %v481
      %v488 = vsub.f32 %v470, %v484
      %v489 = vmul.f32 %v485, 1.442695
      %v490 = vpow.pop %v489
      %v491 = vmul.f32 %v486, 1.442695
      %v492 = vpow.pop %v491
      %v493 = vmul.f32 %v487, 1.442695
      %v494 = vpow.pop %v493
      %v495 = vmul.f32 %v488, 1.442695
      %v496 = vpow.pop %v495
      %v497 = vsel %vm472, %v490, 0.0
      %498 = vadd.xlane.f32.xlu0 %v497
      %v499 = vpop.xlane.xlu0 %498
      %v500 = vsel %vm472, %v492, 0.0
      %501 = vadd.xlane.f32.xlu0 %v500
      %v502 = vpop.xlane.xlu0 %501
      %v503 = vsel %vm472, %v494, 0.0
      %504 = vadd.xlane.f32.xlu0 %v503
      %v505 = vpop.xlane.xlu0 %504
      %v506 = vsel %vm472, %v496, 0.0
      %507 = vadd.xlane.f32.xlu0 %v506
      %v508 = vpop.xlane.xlu0 %507
      %v509 = vrcp.pop %v499
      %v510 = vrcp.pop %v502
      %v511 = vrcp.pop %v505
      %v512 = vrcp.pop %v508
      %v513 = vmul.f32 %v490, %v509
      %v514 = vmul.f32 %v492, %v510
      %v515 = vmul.f32 %v494, %v511
      %v516 = vmul.f32 %v496, %v512
      %517 = vrot.lane.b32.xlu0 %v357, 64
      %v518 = vpop.permute.xlu0 %517
      %v521 = vsel %vm472, %v513, 0
      %523 = vmatpush.msra.mxu0 0.0
      %524 = vmatpush.msra.mxu0 0.0
      %525 = vmatpush.msra.mxu0 0.0
      %526 = vmatpush.msra.mxu0 0.0
      %527 = vmatpush.msra.mxu0 0.0
      %528 = vmatpush.msra.mxu0 0.0
      %529 = vmatpush.msra.mxu0 0.0
      %530 = vmatpush.msra.mxu0 0.0
      %531 = vmatpush.msra.mxu0 0.0
      %532 = vmatpush.msra.mxu0 0.0
      %533 = vmatpush.msra.mxu0 0.0
      %534 = vmatpush.msra.mxu0 0.0
      %535 = vmatpush.msra.mxu0 0.0
      %536 = vmatpush.msra.mxu0 0.0
      %537 = vmatpush.msra.mxu0 0.0
      %538 = vmatpush.msra.mxu0 %v518
      %539 = vmatmul.f32.gmra.mxu0 %v521
      %v540 = vpop.f32.mrf.mxu0
      %v541 = vadd.f32 0.0, %v540
      %542 = vdwg.mxu0
      %543 = vrot.lane.b32.xlu0 %v359, 64
      %v544 = vpop.permute.xlu0 %543
      %v547 = vsel %vm472, %v514, 0
      %549 = vmatpush.msra.mxu0 0.0
      %550 = vmatpush.msra.mxu0 0.0
      %551 = vmatpush.msra.mxu0 0.0
      %552 = vmatpush.msra.mxu0 0.0
      %553 = vmatpush.msra.mxu0 0.0
      %554 = vmatpush.msra.mxu0 0.0
      %555 = vmatpush.msra.mxu0 0.0
      %556 = vmatpush.msra.mxu0 0.0
      %557 = vmatpush.msra.mxu0 0.0
      %558 = vmatpush.msra.mxu0 0.0
      %559 = vmatpush.msra.mxu0 0.0
      %560 = vmatpush.msra.mxu0 0.0
      %561 = vmatpush.msra.mxu0 0.0
      %562 = vmatpush.msra.mxu0 0.0
      %563 = vmatpush.msra.mxu0 0.0
      %564 = vmatpush.msra.mxu0 %v544
      %565 = vmatmul.f32.gmra.mxu0 %v547
      %v566 = vpop.f32.mrf.mxu0
      %v567 = vadd.f32 0.0, %v566
      %568 = vdwg.mxu0
      %569 = vrot.lane.b32.xlu0 %v364, 64
      %v570 = vpop.permute.xlu0 %569
      %v573 = vsel %vm472, %v515, 0
      %575 = vmatpush.msra.mxu0 0.0
      %576 = vmatpush.msra.mxu0 0.0
      %577 = vmatpush.msra.mxu0 0.0
      %578 = vmatpush.msra.mxu0 0.0
      %579 = vmatpush.msra.mxu0 0.0
      %580 = vmatpush.msra.mxu0 0.0
      %581 = vmatpush.msra.mxu0 0.0
      %582 = vmatpush.msra.mxu0 0.0
      %583 = vmatpush.msra.mxu0 0.0
      %584 = vmatpush.msra.mxu0 0.0
      %585 = vmatpush.msra.mxu0 0.0
      %586 = vmatpush.msra.mxu0 0.0
      %587 = vmatpush.msra.mxu0 0.0
      %588 = vmatpush.msra.mxu0 0.0
      %589 = vmatpush.msra.mxu0 0.0
      %590 = vmatpush.msra.mxu0 %v570
      %591 = vmatmul.f32.gmra.mxu0 %v573
      %v592 = vpop.f32.mrf.mxu0
      %v593 = vadd.f32 0.0, %v592
      %594 = vdwg.mxu0
      %595 = vrot.lane.b32.xlu0 %v366, 64
      %v596 = vpop.permute.xlu0 %595
      %v599 = vsel %vm472, %v516, 0
      %601 = vmatpush.msra.mxu0 0.0
      %602 = vmatpush.msra.mxu0 0.0
      %603 = vmatpush.msra.mxu0 0.0
      %604 = vmatpush.msra.mxu0 0.0
      %605 = vmatpush.msra.mxu0 0.0
      %606 = vmatpush.msra.mxu0 0.0
      %607 = vmatpush.msra.mxu0 0.0
      %608 = vmatpush.msra.mxu0 0.0
      %609 = vmatpush.msra.mxu0 0.0
      %610 = vmatpush.msra.mxu0 0.0
      %611 = vmatpush.msra.mxu0 0.0
      %612 = vmatpush.msra.mxu0 0.0
      %613 = vmatpush.msra.mxu0 0.0
      %614 = vmatpush.msra.mxu0 0.0
      %615 = vmatpush.msra.mxu0 0.0
      %616 = vmatpush.msra.mxu0 %v596
      %617 = vmatmul.f32.gmra.mxu0 %v599
      %v618 = vpop.f32.mrf.mxu0
      %v619 = vadd.f32 0.0, %v618
      %620 = vdwg.mxu0
      %623 = vrot.lane.b32.xlu0 %v593, 16
      %v624 = vpop.permute.xlu0 %623
      %625 = vrot.lane.b32.xlu0 %v619, 16
      %v626 = vpop.permute.xlu0 %625
      %v629 = vsel %vm369, %v541, %v624
      %v630 = vsel %vm369, %v567, %v626
      %v631 = vld [vmem:[#allocation5 + $0x10] sm:$0xf]
      %v632 = vld [vmem:[#allocation5 + $0x14] sm:$0xf]
      %v633 = vld [vmem:[#allocation5 + $0x18] sm:$0xf]
      %v634 = vld [vmem:[#allocation5 + $0x1c] sm:$0xf]
      %v635 = vpack.c.bf16 %v630, %v629
      %v640 = vunpack.c.l.b16 %v631
      %v641 = vunpack.c.l.b16 %v632
      %v642 = vunpack.c.l.b16 %v633
      %v643 = vunpack.c.l.b16 %v634
      %v644 = vpack.c.b16 %v641, %v640
      %v645 = vpack.c.b16 %v643, %v642
      %v649 = vsel %vm86, %v635, 0
      %651 = vmatpush.bf16.msra.mxu0 0
      %652 = vmatpush.bf16.msra.mxu0 0
      %653 = vmatpush.bf16.msra.mxu0 0
      %654 = vmatpush.bf16.msra.mxu0 0
      %655 = vmatpush.bf16.msra.mxu0 0
      %656 = vmatpush.bf16.msra.mxu0 0
      %657 = vmatpush.bf16.msra.mxu0 %v645
      %658 = vmatpush.bf16.msra.mxu0 %v644
      %659 = vmatmul.bf16.gmra.mxu0 %v649
      %v660 = vpop.f32.mrf.mxu0
      %v661 = vadd.f32 0.0, %v660
      %v662 = vpop.f32.mrf.mxu0
      %v663 = vadd.f32 0.0, %v662
      %664 = vdwg.mxu0
      %v665 = vadd.f32 %v125, %v661
      %v666 = vadd.f32 %v126, %v663
      %v667 = vsel %vm86, %v665, 0.0
      %668 = vadd.xlane.f32.xlu0 %v667
      %v669 = vpop.xlane.xlu0 %668
      %v670 = vsel %vm86, %v666, 0.0
      %671 = vadd.xlane.f32.xlu0 %v670
      %v672 = vpop.xlane.xlu0 %671
      %v673 = vmul.f32 %v669, %v236
      %v674 = vmul.f32 %v672, %v236
      %v675 = vsub.f32 %v665, %v673
      %v676 = vsub.f32 %v666, %v674
      %v677 = vmul.f32 %v675, %v675
      %v678 = vmul.f32 %v676, %v676
      %v679 = vsel %vm86, %v677, 0.0
      %680 = vadd.xlane.f32.xlu0 %v679
      %v681 = vpop.xlane.xlu0 %680
      %v682 = vsel %vm86, %v678, 0.0
      %683 = vadd.xlane.f32.xlu0 %v682
      %v684 = vpop.xlane.xlu0 %683
      %v685 = vmul.f32 %v681, %v255
      %v686 = vmul.f32 %v684, %v255
      %689 = vrot.lane.b32.xlu0 %v675, 64
      %v690 = vpop.permute.xlu0 %689
      %691 = vrot.lane.b32.xlu0 %v676, 64
      %v692 = vpop.permute.xlu0 %691
      %v695 = vmul.f32 %v258, %v690
      %v696 = vmul.f32 %v258, %v692
      %v697 = vrsqrt.pop %v685
      %v698 = vmul.f32 %v697, %v685
      %v699 = vmul.f32 %v698, %v697
      %v700 = vmul.f32 0.5, %v699
      %v701 = vsub.f32 1.5, %v700
      %v702 = vmul.f32 %v697, %v701
      %v703 = vmul.f32 %v685, %v702
      %vm704 = vcmp.eq.f32.partialorder %v685, inf
      %v705 = vsel %vm704, %v685, %v703
      %vm706 = vcmp.eq.f32.partialorder %v685, 0.0
      %v707 = vand.u32 %v685, 2147483648
      %v708 = vsel %vm706, %v707, %v705
      %v709 = vrsqrt.pop %v686
      %v710 = vmul.f32 %v709, %v686
      %v711 = vmul.f32 %v710, %v709
      %v712 = vmul.f32 0.5, %v711
      %v713 = vsub.f32 1.5, %v712
      %v714 = vmul.f32 %v709, %v713
      %v715 = vmul.f32 %v686, %v714
      %vm716 = vcmp.eq.f32.partialorder %v686, inf
      %v717 = vsel %vm716, %v686, %v715
      %vm718 = vcmp.eq.f32.partialorder %v686, 0.0
      %v719 = vand.u32 %v686, 2147483648
      %v720 = vsel %vm718, %v719, %v717
      %v721 = vadd.f32 %v708, 1e-06
      %v722 = vadd.f32 %v720, 1e-06
      %v723 = vrcp.pop %v721
      %v724 = vmul.f32 %v721, %v723
      %v725 = vsub.f32 1.0, %v724
      %v726 = vmul.f32 %v723, %v725
      %v727 = vadd.f32 %v723, %v726
      %vm728 = vweird.f32 %v721
      %vm729 = vweird.f32 %v723
      %vm730 = vmor %vm728, %vm729
      %v731 = vsel %vm730, %v723, %v727
      %v732 = vand.u32 2147483647, %v721
      %vm733 = vcmp.eq.f32.partialorder %v732, 8.507059e+37
      %v734 = vand.u32 %v721, 2147483648
      %v735 = vor.u32 1.1754944e-38, %v734
      %v736 = vsel %vm733, %v735, %v731
      %v737 = vmul.f32 %v695, %v736
      %v738 = vrcp.pop %v722
      %v739 = vmul.f32 %v722, %v738
      %v740 = vsub.f32 1.0, %v739
      %v741 = vmul.f32 %v738, %v740
      %v742 = vadd.f32 %v738, %v741
      %vm743 = vweird.f32 %v722
      %vm744 = vweird.f32 %v738
      %vm745 = vmor %vm743, %vm744
      %v746 = vsel %vm745, %v738, %v742
      %v747 = vand.u32 2147483647, %v722
      %vm748 = vcmp.eq.f32.partialorder %v747, 8.507059e+37
      %v749 = vand.u32 %v722, 2147483648
      %v750 = vor.u32 1.1754944e-38, %v749
      %v751 = vsel %vm748, %v750, %v746
      %v752 = vmul.f32 %v696, %v751
      %v753 = vadd.f32 %v737, %v319
      %v754 = vadd.f32 %v752, %v319
      %v755 = vpack.c.bf16 %v754, %v753
      %v756 = vperm.slane %v127, 3
      %758 = vrot.lane.b32.xlu0 %v755, 64
      %v759 = vpop.permute.xlu0 %758
      %760 = vrot.lane.b32.xlu0 %v644, 96
      %v761 = vpop.permute.xlu0 %760
      %762 = vrot.lane.b32.xlu0 %v645, 96
      %v763 = vpop.permute.xlu0 %762
      %v767 = vsel %vm86, %v759, 0
      %769 = vmatpush.bf16.msra.mxu0 0
      %770 = vmatpush.bf16.msra.mxu0 0
      %771 = vmatpush.bf16.msra.mxu0 0
      %772 = vmatpush.bf16.msra.mxu0 0
      %773 = vmatpush.bf16.msra.mxu0 0
      %774 = vmatpush.bf16.msra.mxu0 0
      %775 = vmatpush.bf16.msra.mxu0 %v763
      %776 = vmatpush.bf16.msra.mxu0 %v761
      %777 = vmatmul.bf16.gmra.mxu0 %v767
      %v778 = vpop.f32.mrf.mxu0
      %v779 = vadd.f32 %v756, %v778
      %v780 = vpop.f32.mrf.mxu0
      %v781 = vadd.f32 %v756, %v780
      %782 = vdwg.mxu0
      %v783 = vmax.f32 %v779, 0.0
      %v784 = vmax.f32 %v781, 0.0
      %v785 = vld [vmem:[#allocation5 + $0x20] sm:$0xf]
      %v786 = vld [vmem:[#allocation5 + $0x24] sm:$0xf]
      %v787 = vld [vmem:[#allocation5 + $0x28] sm:$0xf]
      %v788 = vld [vmem:[#allocation5 + $0x2c] sm:$0xf]
      %v789 = vld [vmem:[#allocation5 + $0x30] sm:$0xf]
      %v790 = vld [vmem:[#allocation5 + $0x34] sm:$0xf]
      %v791 = vld [vmem:[#allocation5 + $0x38] sm:$0xf]
      %v792 = vld [vmem:[#allocation5 + $0x3c] sm:$0xf]
      %v793 = vpack.c.bf16 %v784, %v783
      %v794 = vperm.slane %v127, 2
      %v803 = vunpack.c.l.b16 %v785
      %v804 = vunpack.c.l.b16 %v786
      %v805 = vunpack.c.l.b16 %v787
      %v806 = vunpack.c.l.b16 %v788
      %v807 = vunpack.c.l.b16 %v789
      %v808 = vunpack.c.l.b16 %v790
      %v809 = vunpack.c.l.b16 %v791
      %v810 = vunpack.c.l.b16 %v792
      %v811 = vpack.c.b16 %v804, %v803
      %v812 = vpack.c.b16 %v806, %v805
      %v813 = vpack.c.b16 %v808, %v807
      %v814 = vpack.c.b16 %v810, %v809
      %820 = vrot.lane.b32.xlu0 %v794, 64
      %v821 = vpop.permute.xlu0 %820
      %vm823 = vcmask 523264
      %v825 = vsel %vm823, %v793, 0
      %827 = vmatpush.bf16.msra.mxu0 0
      %828 = vmatpush.bf16.msra.mxu0 0
      %829 = vmatpush.bf16.msra.mxu0 0
      %830 = vmatpush.bf16.msra.mxu0 0
      %831 = vmatpush.bf16.msra.mxu0 %v814
      %832 = vmatpush.bf16.msra.mxu0 %v813
      %833 = vmatpush.bf16.msra.mxu0 %v812
      %834 = vmatpush.bf16.msra.mxu0 %v811
      %835 = vmatmul.bf16.gmra.mxu0 %v825
      %v836 = vpop.f32.mrf.mxu0
      %v837 = vadd.f32 %v821, %v836
      %v838 = vpop.f32.mrf.mxu0
      %v839 = vadd.f32 %v821, %v838
      %840 = vdwg.mxu0
      %v841 = vadd.f32 %v665, %v837
      %v842 = vadd.f32 %v666, %v839
      %v843 = vmul.f32 %v841, %v222
      %v844 = vmul.f32 %v842, %v223
      %v845 = vsub.f32 1.0, %v222
      %v846 = vsub.f32 1.0, %v223
      %v847 = vmul.f32 %v112, %v845
      %v848 = vmul.f32 %v113, %v846
      %v849 = vadd.f32 %v843, %v847
      %v850 = vadd.f32 %v844, %v848
    $region34: #{encoder_forward.1} parent=1 // loop_footer
      %s109 = sadd.s32 1, %s105
    $region35: #{encoder_forward.1} parent=1 // loop_footer_branch
      %104 = sbr.rel target = $region31
    $region36: #{encoder_forward.1} parent=1 // loop_exit
      _
    %v851 = vld [vmem:[#allocation7] sm:$0xff]
    %v852 = vsel %vm86, %v112, 0.0
    %853 = vadd.xlane.f32.xlu0 %v852
    %v854 = vpop.xlane.xlu0 %853
    %v855 = vsel %vm86, %v113, 0.0
    %856 = vadd.xlane.f32.xlu0 %v855
    %v857 = vpop.xlane.xlu0 %856
    %v858 = vrcp.pop 32.0
    %v859 = vmul.f32 32.0, %v858
    %v860 = vsub.f32 1.0, %v859
    %v861 = vmul.f32 %v858, %v860
    %v862 = vadd.f32 %v858, %v861
    %vm863 = vweird.f32 %v858
    %v864 = vsel %vm863, %v858, %v862
    %v865 = vmul.f32 %v854, %v864
    %v866 = vmul.f32 %v857, %v864
    %v867 = vsub.f32 %v112, %v865
    %v868 = vsub.f32 %v113, %v866
    %v869 = vmul.f32 %v867, %v867
    %v870 = vmul.f32 %v868, %v868
    %v871 = vsel %vm86, %v869, 0.0
    %872 = vadd.xlane.f32.xlu0 %v871
    %v873 = vpop.xlane.xlu0 %872
    %v874 = vsel %vm86, %v870, 0.0
    %875 = vadd.xlane.f32.xlu0 %v874
    %v876 = vpop.xlane.xlu0 %875
    %v877 = vrcp.pop 31.0
    %v878 = vmul.f32 31.0, %v877
    %v879 = vsub.f32 1.0, %v878
    %v880 = vmul.f32 %v877, %v879
    %v881 = vadd.f32 %v877, %v880
    %vm882 = vweird.f32 %v877
    %v883 = vsel %vm882, %v877, %v881
    %v884 = vmul.f32 %v873, %v883
    %v885 = vmul.f32 %v876, %v883
    %v886 = vperm.slane %v851, 2
    %v887 = vmul.f32 %v886, %v867
    %v888 = vmul.f32 %v886, %v868
    %v889 = vrsqrt.pop %v884
    %v890 = vmul.f32 %v889, %v884
    %v891 = vmul.f32 %v890, %v889
    %v892 = vmul.f32 0.5, %v891
    %v893 = vsub.f32 1.5, %v892
    %v894 = vmul.f32 %v889, %v893
    %v895 = vmul.f32 %v884, %v894
    %vm896 = vcmp.eq.f32.partialorder %v884, inf
    %v897 = vsel %vm896, %v884, %v895
    %vm898 = vcmp.eq.f32.partialorder %v884, 0.0
    %v899 = vand.u32 %v884, 2147483648
    %v900 = vsel %vm898, %v899, %v897
    %v901 = vrsqrt.pop %v885
    %v902 = vmul.f32 %v901, %v885
    %v903 = vmul.f32 %v902, %v901
    %v904 = vmul.f32 0.5, %v903
    %v905 = vsub.f32 1.5, %v904
    %v906 = vmul.f32 %v901, %v905
    %v907 = vmul.f32 %v885, %v906
    %vm908 = vcmp.eq.f32.partialorder %v885, inf
    %v909 = vsel %vm908, %v885, %v907
    %vm910 = vcmp.eq.f32.partialorder %v885, 0.0
    %v911 = vand.u32 %v885, 2147483648
    %v912 = vsel %vm910, %v911, %v909
    %v913 = vadd.f32 %v900, 1e-06
    %v914 = vadd.f32 %v912, 1e-06
    %v915 = vrcp.pop %v913
    %v916 = vmul.f32 %v913, %v915
    %v917 = vsub.f32 1.0, %v916
    %v918 = vmul.f32 %v915, %v917
    %v919 = vadd.f32 %v915, %v918
    %vm920 = vweird.f32 %v913
    %vm921 = vweird.f32 %v915
    %vm922 = vmor %vm920, %vm921
    %v923 = vsel %vm922, %v915, %v919
    %v924 = vand.u32 2147483647, %v913
    %vm925 = vcmp.eq.f32.partialorder %v924, 8.507059e+37
    %v926 = vand.u32 %v913, 2147483648
    %v927 = vor.u32 1.1754944e-38, %v926
    %v928 = vsel %vm925, %v927, %v923
    %v929 = vmul.f32 %v887, %v928
    %v930 = vrcp.pop %v914
    %v931 = vmul.f32 %v914, %v930
    %v932 = vsub.f32 1.0, %v931
    %v933 = vmul.f32 %v930, %v932
    %v934 = vadd.f32 %v930, %v933
    %vm935 = vweird.f32 %v914
    %vm936 = vweird.f32 %v930
    %vm937 = vmor %vm935, %vm936
    %v938 = vsel %vm937, %v930, %v934
    %v939 = vand.u32 2147483647, %v914
    %vm940 = vcmp.eq.f32.partialorder %v939, 8.507059e+37
    %v941 = vand.u32 %v914, 2147483648
    %v942 = vor.u32 1.1754944e-38, %v941
    %v943 = vsel %vm940, %v942, %v938
    %v944 = vmul.f32 %v888, %v943
    %946 = vrot.lane.b32.xlu0 %v886, 96
    %v947 = vpop.permute.xlu0 %946
    %v949 = vadd.f32 %v929, %v947
    %v950 = vadd.f32 %v944, %v947
    %v951 = vsel %vm86, %v949, %v116
    %v952 = vsel %vm86, %v950, %v117
    %vm953 = vcmask 269312
    %v954 = vsel %vm953, %v951, %v118
    %v955 = vsel %vm953, %v952, %v119
    %vm956 = vcmask 277504
    %v957 = vsel %vm956, %v954, 0.0
    %v958 = vsel %vm956, %v955, 0.0
    %959 = vst [vmem:[%s4] sm:$0xff] %v957
    %960 = vst [vmem:[%s4 + $0x8] sm:$0xff] %v958
    // Predicated region
    $region37: #{encoder_forward.1} parent=1 // pred_check
      _
    $region38: #{encoder_forward.1} parent=1 // pred_check_branch
      %962 = sbr.rel (0) target = $region40
    $region39: #{encoder_forward.1} parent=1 // pred_region
      _
    $region40: #{encoder_forward.1} parent=1 // pred_fallthru
      _
    // Predicated region
    $region41: #{encoder_forward.1} parent=1 // pred_check
      _
    $region42: #{encoder_forward.1} parent=1 // pred_check_branch
      %964 = sbr.rel (0) target = $region44
    $region43: #{encoder_forward.1} parent=1 // pred_region
      _
    $region44: #{encoder_forward.1} parent=1 // pred_fallthru
      _
    %965 = vsyncpa [#allocation4], 1
    %966 = vsyncpa [#allocation6], 1

</llo_original>
